<compile_context>
chip_gen: v7x
topology: tpu7x:2x2x1
jax: 0.10.0
libtpu: 0.0.40
codegen_flags: <defaults>
</compile_context>

<pallas_src>
import jax
import jax.numpy as jnp
from jax.experimental import pallas as pl
from jax.experimental.pallas import tpu as pltpu


def _round_up(v, m):
    return ((v + m - 1) // m) * m


# ---------------------------------------------------------------------------
# Kernel: one (p, TM) column-tile of x^T -> (1, TM) row of sigmoid(MLP(x)).
# Weights are in PyTorch orientation (out, in); biases are (out, 1) f32.
# ---------------------------------------------------------------------------
def _pred_kernel(xt_ref, w1, b1, w2, b2, w3, b3, w4, b4, pred_ref):
    xt = xt_ref[...]                                                     # (p, TM) bf16
    h = jnp.dot(w1[...], xt, preferred_element_type=jnp.float32) + b1[...]
    h = jnp.maximum(h, 0.0)
    h = jnp.dot(w2[...], h.astype(w2.dtype), preferred_element_type=jnp.float32) + b2[...]
    h = jnp.maximum(h, 0.0)
    h = jnp.dot(w3[...], h.astype(w3.dtype), preferred_element_type=jnp.float32) + b3[...]
    h = jnp.maximum(h, 0.0)
    z = jnp.dot(w4[...], h.astype(w4.dtype), preferred_element_type=jnp.float32) + b4[...]
    # sigmoid: exp and approximate reciprocal both run on the EUP slot
    pred = pl.reciprocal(1.0 + jnp.exp(-z), approx=True)                 # (1, TM) f32
    pred_ref[...] = pred.astype(pred_ref.dtype)


# ---------------------------------------------------------------------------
# Parameter helpers
# ---------------------------------------------------------------------------
def init_share_predictor_params(covar_size, key):
    """f32 params matching SharePredictor._init_weights: W ~ N(0, 0.02), b = 0.
    Weights are stored in PyTorch nn.Linear orientation: W is (out, in)."""
    p = covar_size
    dims = [(6 * p, p), (4 * p, 6 * p), (2 * p, 4 * p), (1, 2 * p)]      # (out, in)
    params = []
    for dout, din in dims:
        key, sub = jax.random.split(key)
        w = 0.02 * jax.random.normal(sub, (dout, din), dtype=jnp.float32)
        b = jnp.zeros((dout,), dtype=jnp.float32)
        params.append((w, b))
    return params


def prepare_params(params, compute_dtype=jnp.bfloat16):
    """Zero-pad hidden dims up to multiples of 128 and cast weights to the MXU
    compute dtype.  Biases become (out, 1) f32 columns (broadcast over lanes).
    Padding with zeros is exact for the MLP output."""
    (w1, b1), (w2, b2), (w3, b3), (w4, b4) = params
    p = w1.shape[1]
    h1 = _round_up(w1.shape[0], 128)
    h2 = _round_up(w2.shape[0], 128)
    h3 = _round_up(w3.shape[0], 128)

    def padw(w, rows, cols):
        return jnp.pad(w, ((0, rows - w.shape[0]), (0, cols - w.shape[1]))).astype(compute_dtype)

    def padb(b, rows):
        return jnp.pad(b, (0, rows - b.shape[0])).reshape(rows, 1).astype(jnp.float32)

    return [
        (padw(w1, h1, p), padb(b1, h1)),
        (padw(w2, h2, h1), padb(b2, h2)),
        (padw(w3, h3, h2), padb(b3, h3)),
        (padw(w4, 1, h3), padb(b4, 1)),
    ]


# ---------------------------------------------------------------------------
# VMEM budgeting (generation-aware)
# ---------------------------------------------------------------------------
def _vmem_budget_bytes():
    try:
        cap = getattr(pltpu.get_tpu_info(), "vmem_capacity_bytes", None)
        if cap:
            return int(cap * 7 // 8)       # leave headroom below physical VMEM
    except Exception:
        pass
    return 56 * 1024 * 1024                # conservative fallback (v7x: 64 MiB total)


def _vmem_limit_bytes(weights, w_bytes, single_buffer, p, tm):
    h_dims = [weights[0].shape[0], weights[2].shape[0], weights[4].shape[0], 1]
    act_bytes = sum(h_dims) * tm * 4                 # f32 activations for one row tile
    io_bytes = 2 * (p * tm * 2 + tm * 4)             # double-buffered x tile + pred tile
    wbuf = 1 if single_buffer else 2                 # constant blocks double-buffer by default
    needed = wbuf * w_bytes + 2 * act_bytes + io_bytes + (4 << 20)
    return int(min(_vmem_budget_bytes(), max(32 << 20, needed)))


# ---------------------------------------------------------------------------
# Forward pass
# ---------------------------------------------------------------------------
def share_predictor_forward(covar_df, prepared_params, targets=None, *, tile_rows=1024):
    """covar_df: (N, p); targets: (N,) or None.  Returns (pred (N,1) f32, loss or None)."""
    (w1, b1), (w2, b2), (w3, b3), (w4, b4) = prepared_params
    N, p = covar_df.shape
    compute_dtype = w1.dtype

    # Lane-dense row tiles (multiples of 128); cap at cdiv(N,2) so the grid has
    # >=2 steps whenever N > 128 (v7x megacore + DMA/compute overlap).
    tile_rows = max(128, _round_up(int(tile_rows), 128))
    tm = min(tile_rows, max(128, _round_up(pl.cdiv(N, 2), 128)))
    num_tiles = pl.cdiv(N, tm)
    n_pad = num_tiles * tm

    # Feature-major layout: rows become lanes.  Zero-pad N up to the tile so the
    # last tile never sees undefined data (padding rows are sliced away below).
    x_t = jnp.pad(covar_df.astype(compute_dtype).T, ((0, 0), (0, n_pad - N)))

    weights = (w1, b1, w2, b2, w3, b3, w4, b4)
    w_bytes = sum(int(a.size) * a.dtype.itemsize for a in weights)
    single_buffer = w_bytes > (8 << 20)              # only matters for large covar_size

    def const_spec(a):
        idx_map = lambda i: (0, 0)
        if single_buffer:
            try:                                     # single-buffer resident constants
                return pl.BlockSpec(a.shape, idx_map, pipeline_mode=pl.Buffered(1))
            except Exception:                        # older jax without pipeline_mode
                pass
        return pl.BlockSpec(a.shape, idx_map)

    in_specs = [pl.BlockSpec((p, tm), lambda i: (0, i))] + [const_spec(a) for a in weights]
    out_spec = pl.BlockSpec((1, tm), lambda i: (0, i))

    pred_row = pl.pallas_call(
        _pred_kernel,
        out_shape=jax.ShapeDtypeStruct((1, n_pad), jnp.float32),
        grid=(num_tiles,),
        in_specs=in_specs,
        out_specs=out_spec,
        compiler_params=pltpu.CompilerParams(
            dimension_semantics=("parallel",),
            vmem_limit_bytes=_vmem_limit_bytes(weights, w_bytes, single_buffer, p, tm)),
    )(x_t, *weights)

    pred = pred_row.reshape(n_pad, 1)[:N]            # (N, 1) f32

    if targets is None:
        return pred, None

    # PyTorch semantics: (N,1) - (N,) broadcasts to (N,N); its mean in closed form is
    #   mean_i(p_i^2) - 2*mean_i(p_i)*mean_j(t_j) + mean_j(t_j^2)
    # computed from means (not raw sums) to avoid O(N^2) magnitudes in f32.
    t = targets.astype(jnp.float32)
    pv = pred[:, 0]
    mean_p, mean_p2 = jnp.mean(pv), jnp.mean(pv * pv)
    mean_t, mean_t2 = jnp.mean(t), jnp.mean(t * t)
    loss = mean_p2 - 2.0 * mean_p * mean_t + mean_t2
    return pred, loss


# ---------------------------------------------------------------------------
# Pure-JAX reference (PyTorch orientation: y = x @ W.T + b)
# ---------------------------------------------------------------------------
def _reference_forward(covar_df, params_f32, targets=None):
    h = covar_df.astype(jnp.float32)
    for i, (w, b) in enumerate(params_f32):
        h = h @ w.T + b[None, :]
        if i < 3:
            h = jnp.maximum(h, 0.0)
    pred = jax.nn.sigmoid(h)
    if targets is None:
        return pred, None
    diff = pred - targets.astype(jnp.float32)[None, :]   # (N,1)-(N,) -> (N,N)
    return pred, jnp.mean(diff * diff)


if __name__ == "__main__":
    N, P = 200, 4   # N not a multiple of the tile -> exercises padding; p covariates
    key = jax.random.PRNGKey(0)
    k_params, k_x, k_t = jax.random.split(key, 3)

    params_f32 = init_share_predictor_params(P, k_params)
    params = prepare_params(params_f32, compute_dtype=jnp.bfloat16)

    # "tensor of integers" inputs / targets (integers are exact in bf16)
    covar_df = jax.random.randint(k_x, (N, P), 0, 10).astype(jnp.float32)
    targets = jax.random.randint(k_t, (N,), 0, 2).astype(jnp.float32)

    pred, loss = share_predictor_forward(covar_df, params, targets, tile_rows=1024)
    pred = jax.block_until_ready(pred)
    loss = jax.block_until_ready(loss)

    ref_pred, ref_loss = _reference_forward(covar_df, params_f32, targets)
    assert pred.shape == (N, 1)
    assert jnp.allclose(pred, ref_pred, atol=5e-3), "pred mismatch"
    assert jnp.allclose(loss, ref_loss, atol=5e-3, rtol=1e-2), "loss mismatch"

    # targets=None path (same kernel, no loss math in the wrapper)
    pred_only, loss_none = share_predictor_forward(covar_df, params, None, tile_rows=1024)
    jax.block_until_ready(pred_only)
    assert loss_none is None
    assert jnp.allclose(pred_only, ref_pred, atol=5e-3), "pred-only mismatch"

    print("KERNEL_OK")
</pallas_src>

<mosaic_0001>
module attributes {stable_mosaic.version = 11 : i64} {
  func.func @_pred_kernel(%arg0: i32, %arg1: memref<4x128xbf16, #tpu.memory_space<vmem>>, %arg2: memref<128x4xbf16, #tpu.memory_space<vmem>>, %arg3: memref<128x1xf32, #tpu.memory_space<vmem>>, %arg4: memref<128x128xbf16, #tpu.memory_space<vmem>>, %arg5: memref<128x1xf32, #tpu.memory_space<vmem>>, %arg6: memref<128x128xbf16, #tpu.memory_space<vmem>>, %arg7: memref<128x1xf32, #tpu.memory_space<vmem>>, %arg8: memref<1x128xbf16, #tpu.memory_space<vmem>>, %arg9: memref<1x1xf32, #tpu.memory_space<vmem>>, %arg10: memref<1x128xf32, #tpu.memory_space<vmem>>) attributes {dimension_semantics = [#tpu.dimension_semantics<parallel>], iteration_bounds = array<i64: 2>, scalar_prefetch = 0 : i64, scratch_operands = 0 : i64, tpu.core_type = #tpu.core_type<tc>, window_params = [{transform_indices = @transform_0, window_bounds = array<i64: 4, 128>}, {pipeline_mode = #tpu.pipeline_mode<synchronous>, transform_indices = @transform_1, window_bounds = array<i64: 128, 4>}, {pipeline_mode = #tpu.pipeline_mode<synchronous>, transform_indices = @transform_2, window_bounds = array<i64: 128, 1>}, {pipeline_mode = #tpu.pipeline_mode<synchronous>, transform_indices = @transform_3, window_bounds = array<i64: 128, 128>}, {pipeline_mode = #tpu.pipeline_mode<synchronous>, transform_indices = @transform_4, window_bounds = array<i64: 128, 1>}, {pipeline_mode = #tpu.pipeline_mode<synchronous>, transform_indices = @transform_5, window_bounds = array<i64: 128, 128>}, {pipeline_mode = #tpu.pipeline_mode<synchronous>, transform_indices = @transform_6, window_bounds = array<i64: 128, 1>}, {pipeline_mode = #tpu.pipeline_mode<synchronous>, transform_indices = @transform_7, window_bounds = array<i64: 1, 128>}, {pipeline_mode = #tpu.pipeline_mode<synchronous>, transform_indices = @transform_8, window_bounds = array<i64: 1, 1>}, {transform_indices = @transform_9, window_bounds = array<i64: 1, 128>}]} {
    %c0 = arith.constant 0 : index
    %c0_0 = arith.constant 0 : index
    %0 = vector.load %arg1[%c0, %c0_0] : memref<4x128xbf16, #tpu.memory_space<vmem>>, vector<4x128xbf16>
    %c0_1 = arith.constant 0 : index
    %c0_2 = arith.constant 0 : index
    %1 = vector.load %arg2[%c0_1, %c0_2] : memref<128x4xbf16, #tpu.memory_space<vmem>>, vector<128x4xbf16>
    %cst = arith.constant dense<0.000000e+00> : vector<128x128xf32>
    %2 = tpu.matmul %1, %0, %cst {dimension_numbers = #tpu.dot_dimension_numbers<[1], [0], [0], [1], [0, 0, 1, 1], [], []>} : vector<128x4xbf16>, vector<4x128xbf16>, vector<128x128xf32> -> vector<128x128xf32>
    %c0_3 = arith.constant 0 : index
    %c0_4 = arith.constant 0 : index
    %3 = vector.load %arg3[%c0_3, %c0_4] : memref<128x1xf32, #tpu.memory_space<vmem>>, vector<128x1xf32>
    %4 = vector.broadcast %3 : vector<128x1xf32> to vector<128x128xf32>
    %5 = arith.addf %2, %4 : vector<128x128xf32>
    %cst_5 = arith.constant 0.000000e+00 : f32
    %6 = vector.broadcast %cst_5 : f32 to vector<128x128xf32>
    %7 = arith.maximumf %5, %6 : vector<128x128xf32>
    %c0_6 = arith.constant 0 : index
    %c0_7 = arith.constant 0 : index
    %8 = vector.load %arg4[%c0_6, %c0_7] : memref<128x128xbf16, #tpu.memory_space<vmem>>, vector<128x128xbf16>
    %9 = arith.truncf %7 : vector<128x128xf32> to vector<128x128xbf16>
    %cst_8 = arith.constant dense<0.000000e+00> : vector<128x128xf32>
    %10 = tpu.matmul %8, %9, %cst_8 {dimension_numbers = #tpu.dot_dimension_numbers<[1], [0], [0], [1], [0, 0, 1, 1], [], []>} : vector<128x128xbf16>, vector<128x128xbf16>, vector<128x128xf32> -> vector<128x128xf32>
    %c0_9 = arith.constant 0 : index
    %c0_10 = arith.constant 0 : index
    %11 = vector.load %arg5[%c0_9, %c0_10] : memref<128x1xf32, #tpu.memory_space<vmem>>, vector<128x1xf32>
    %12 = vector.broadcast %11 : vector<128x1xf32> to vector<128x128xf32>
    %13 = arith.addf %10, %12 : vector<128x128xf32>
    %cst_11 = arith.constant 0.000000e+00 : f32
    %14 = vector.broadcast %cst_11 : f32 to vector<128x128xf32>
    %15 = arith.maximumf %13, %14 : vector<128x128xf32>
    %c0_12 = arith.constant 0 : index
    %c0_13 = arith.constant 0 : index
    %16 = vector.load %arg6[%c0_12, %c0_13] : memref<128x128xbf16, #tpu.memory_space<vmem>>, vector<128x128xbf16>
    %17 = arith.truncf %15 : vector<128x128xf32> to vector<128x128xbf16>
    %cst_14 = arith.constant dense<0.000000e+00> : vector<128x128xf32>
    %18 = tpu.matmul %16, %17, %cst_14 {dimension_numbers = #tpu.dot_dimension_numbers<[1], [0], [0], [1], [0, 0, 1, 1], [], []>} : vector<128x128xbf16>, vector<128x128xbf16>, vector<128x128xf32> -> vector<128x128xf32>
    %c0_15 = arith.constant 0 : index
    %c0_16 = arith.constant 0 : index
    %19 = vector.load %arg7[%c0_15, %c0_16] : memref<128x1xf32, #tpu.memory_space<vmem>>, vector<128x1xf32>
    %20 = vector.broadcast %19 : vector<128x1xf32> to vector<128x128xf32>
    %21 = arith.addf %18, %20 : vector<128x128xf32>
    %cst_17 = arith.constant 0.000000e+00 : f32
    %22 = vector.broadcast %cst_17 : f32 to vector<128x128xf32>
    %23 = arith.maximumf %21, %22 : vector<128x128xf32>
    %c0_18 = arith.constant 0 : index
    %c0_19 = arith.constant 0 : index
    %24 = vector.load %arg8[%c0_18, %c0_19] : memref<1x128xbf16, #tpu.memory_space<vmem>>, vector<1x128xbf16>
    %25 = arith.truncf %23 : vector<128x128xf32> to vector<128x128xbf16>
    %cst_20 = arith.constant dense<0.000000e+00> : vector<1x128xf32>
    %26 = tpu.matmul %24, %25, %cst_20 {dimension_numbers = #tpu.dot_dimension_numbers<[1], [0], [0], [1], [0, 0, 1, 1], [], []>} : vector<1x128xbf16>, vector<128x128xbf16>, vector<1x128xf32> -> vector<1x128xf32>
    %c0_21 = arith.constant 0 : index
    %c0_22 = arith.constant 0 : index
    %27 = vector.load %arg9[%c0_21, %c0_22] : memref<1x1xf32, #tpu.memory_space<vmem>>, vector<1x1xf32>
    %28 = vector.broadcast %27 : vector<1x1xf32> to vector<1x128xf32>
    %29 = arith.addf %26, %28 : vector<1x128xf32>
    %cst_23 = arith.constant 0.000000e+00 : f32
    %30 = vector.broadcast %cst_23 : f32 to vector<1x128xf32>
    %31 = arith.subf %30, %29 : vector<1x128xf32>
    %32 = math.exp %31 : vector<1x128xf32>
    %cst_24 = arith.constant 1.000000e+00 : f32
    %33 = vector.broadcast %cst_24 : f32 to vector<1x128xf32>
    %34 = arith.addf %33, %32 : vector<1x128xf32>
    %35 = tpu.reciprocal %34 {approx = true} : vector<1x128xf32> -> vector<1x128xf32>
    %c0_25 = arith.constant 0 : index
    %c0_26 = arith.constant 0 : index
    %36 = vector.load %arg10[%c0_25, %c0_26] : memref<1x128xf32, #tpu.memory_space<vmem>>, vector<1x128xf32>
    tpu.vector_store %arg10[%c0_25, %c0_26], %35 {strides = array<i32>} : memref<1x128xf32, #tpu.memory_space<vmem>>, vector<1x128xf32>,
    return
  }
  func.func @transform_0(%arg0: i32) -> (i32, i32) {
    %c0_i32 = arith.constant 0 : i32
    %c0_i32_0 = arith.constant 0 : i32
    return %c0_i32, %arg0 : i32, i32
  }
  func.func @transform_1(%arg0: i32) -> (i32, i32) {
    %c0_i32 = arith.constant 0 : i32
    %c0_i32_0 = arith.constant 0 : i32
    %c0_i32_1 = arith.constant 0 : i32
    return %c0_i32, %c0_i32_0 : i32, i32
  }
  func.func @transform_2(%arg0: i32) -> (i32, i32) {
    %c0_i32 = arith.constant 0 : i32
    %c0_i32_0 = arith.constant 0 : i32
    %c0_i32_1 = arith.constant 0 : i32
    return %c0_i32, %c0_i32_0 : i32, i32
  }
  func.func @transform_3(%arg0: i32) -> (i32, i32) {
    %c0_i32 = arith.constant 0 : i32
    %c0_i32_0 = arith.constant 0 : i32
    %c0_i32_1 = arith.constant 0 : i32
    return %c0_i32, %c0_i32_0 : i32, i32
  }
  func.func @transform_4(%arg0: i32) -> (i32, i32) {
    %c0_i32 = arith.constant 0 : i32
    %c0_i32_0 = arith.constant 0 : i32
    %c0_i32_1 = arith.constant 0 : i32
    return %c0_i32, %c0_i32_0 : i32, i32
  }
  func.func @transform_5(%arg0: i32) -> (i32, i32) {
    %c0_i32 = arith.constant 0 : i32
    %c0_i32_0 = arith.constant 0 : i32
    %c0_i32_1 = arith.constant 0 : i32
    return %c0_i32, %c0_i32_0 : i32, i32
  }
  func.func @transform_6(%arg0: i32) -> (i32, i32) {
    %c0_i32 = arith.constant 0 : i32
    %c0_i32_0 = arith.constant 0 : i32
    %c0_i32_1 = arith.constant 0 : i32
    return %c0_i32, %c0_i32_0 : i32, i32
  }
  func.func @transform_7(%arg0: i32) -> (i32, i32) {
    %c0_i32 = arith.constant 0 : i32
    %c0_i32_0 = arith.constant 0 : i32
    %c0_i32_1 = arith.constant 0 : i32
    return %c0_i32, %c0_i32_0 : i32, i32
  }
  func.func @transform_8(%arg0: i32) -> (i32, i32) {
    %c0_i32 = arith.constant 0 : i32
    %c0_i32_0 = arith.constant 0 : i32
    %c0_i32_1 = arith.constant 0 : i32
    return %c0_i32, %c0_i32_0 : i32, i32
  }
  func.func @transform_9(%arg0: i32) -> (i32, i32) {
    %c0_i32 = arith.constant 0 : i32
    %c0_i32_0 = arith.constant 0 : i32
    return %c0_i32, %arg0 : i32, i32
  }
}

</mosaic_0001>

<llo_original>
// kernel: tpu_custom_call.1
$region0: #{tpu_custom_call.1}
  #allocation0 [shape = 'u32[]', space=smem, size = 0x4, offset = 0x4, fixed_abs, tag = 'smem constant byte address 0x4 - core index']
  #allocation1 [shape = 'u32[144,128]{1,0:T(1,128)}', space=vmem, size = 0x12000, scoped, tag = 'internal scratch']
  #allocation2 [shape = 'f32[1,1]{1,0:T(1,128)S(1)}', space=vmem, size = 0x200, scoped, tag = 'scoped memory for tpu_custom_call.1']
  %s0 = inlined_call_operand.vmem [shape: bf16[4,256], index: 0, kind: input, shape index: {}]
  %s1 = inlined_call_operand.vmem [shape: bf16[128,4], index: 1, kind: input, shape index: {}]
  %s2 = inlined_call_operand.vmem [shape: f32[128,1], index: 2, kind: input, shape index: {}]
  %s3 = inlined_call_operand.vmem [shape: bf16[128,128], index: 3, kind: input, shape index: {}]
  %s4 = inlined_call_operand.vmem [shape: f32[128,1], index: 4, kind: input, shape index: {}]
  %s5 = inlined_call_operand.vmem [shape: bf16[128,128], index: 5, kind: input, shape index: {}]
  %s6 = inlined_call_operand.vmem [shape: f32[128,1], index: 6, kind: input, shape index: {}]
  %s7 = inlined_call_operand.vmem [shape: bf16[1,128], index: 7, kind: input, shape index: {}]
  %s8 = inlined_call_operand.<no memory space> [shape: f32[1,1], index: 8, kind: input, shape index: {}]
  %s9 = inlined_call_operand.hbm [shape: f32[1,256], index: 9, kind: output, shape index: {}]
  %s10 = sld [smem:[#allocation0]]
  $region69: #{tpu_custom_call.1} parent=0
    _
  %s12 = ssub.s32 1, %s10
  %s13 = scalar_select 0, %s12, %s10
  %v14 = vstv %s8
  %15 = vst [vmem:[#allocation2] sm:$0x1] %v14
  $region1: #{tpu_custom_call.1} parent=0
    #allocation3 [shape = 'u8[1024]{0}', space=vmem, size = 0x400, scoped, tag = 'output window, operand 0']
    #allocation4 [shape = 's32[2]{0}', space=sflag, size = 0x8, scoped, tag = 'scoped memory for tpu_custom_call.1']
    %16 = vsyncpa [#allocation4], 0
    %s17 = scalar_lea.sflag [#allocation4], 1
    %18 = vsyncpa %s17, 0
    loop: start=0, step=1, limit=4
    $region2: #{tpu_custom_call.1} parent=1 // loop_pre_header
      _
    $region3: #{tpu_custom_call.1} parent=1 // loop_header
      %s20 = sphi 0, %s24
      %p21 = scmp.ge.s32.totalorder %s20, 4
      %s30 = sphi 0, %s32
      %s33 = sphi 0, %s30
      %s34 = sphi 0, %s33
      %s50 = sphi 0, %s34
      %s54 = sphi 0, %s54
      %s56 = sphi 0, %s54
      %s57 = sphi 0, %s56
      %s71 = sphi 0, %s57
      %s75 = sphi 0, %s75
      %s77 = sphi 0, %s75
      %s78 = sphi 0, %s77
      %s92 = sphi 0, %s78
      %s96 = sphi 0, %s96
      %s98 = sphi 0, %s96
      %s99 = sphi 0, %s98
      %s113 = sphi 0, %s99
      %s117 = sphi 0, %s117
      %s119 = sphi 0, %s117
      %s120 = sphi 0, %s119
      %s134 = sphi 0, %s120
      %s138 = sphi 0, %s138
      %s140 = sphi 0, %s138
      %s141 = sphi 0, %s140
      %s155 = sphi 0, %s141
      %s159 = sphi 0, %s159
      %s161 = sphi 0, %s159
      %s162 = sphi 0, %s161
      %s176 = sphi 0, %s162
      %s180 = sphi 0, %s180
      %s182 = sphi 0, %s180
      %s183 = sphi 0, %s182
      %s197 = sphi 0, %s183
      %s201 = sphi 0, %s201
      %s203 = sphi 0, %s201
      %s204 = sphi 0, %s203
      %s218 = sphi 0, %s204
      %s224 = sphi 0, %s226
      %s227 = sphi 0, %s224
      %s228 = sphi 0, %s227
      %s244 = sphi 0, %s228
    $region4: #{tpu_custom_call.1} parent=1 // loop_header_branch
      %23 = sbr.rel (%p21) target = $region8
    $region5: #{tpu_custom_call.1} parent=1 // loop_body
      %s25 = ssub.s32 %s20, 1
      %s26 = ssub.s32 %s20, 2
      %s27 = sadd.s32 %s20, 1
      %s28 = ssub.s32 %s20, %s27
      %p29 = scmp.eq.s32.totalorder %s28, 0
      %s31 = sadd.s32 %s30, 1
      %s32 = scalar_select %p29, %s30, %s31
      %p35 = pneg %p29
      %p36 = scmp.eq.s32.totalorder %s20, 1
      %p37 = por %p35, %p36
      %p38 = scmp.ne.s32.totalorder %s30, %s33
      %p39 = scmp.eq.s32.totalorder %s20, 0
      %p40 = por %p38, %p39
      %p41 = scmp.ne.s32.totalorder %s30, %s33
      %p42 = scmp.eq.s32.totalorder %s25, 1
      %p43 = por %p41, %p42
      %p44 = scmp.ne.s32.totalorder %s33, %s34
      %p45 = scmp.eq.s32.totalorder %s25, 0
      %p46 = por %p44, %p45
      %p47 = scmp.ne.s32.totalorder %s33, %s34
      %p48 = scmp.eq.s32.totalorder %s26, 1
      %p49 = por %p47, %p48
      %p51 = scmp.ne.s32.totalorder %s34, %s50
      %p52 = scmp.eq.s32.totalorder %s26, 0
      %p53 = por %p51, %p52
      %s55 = sadd.s32 %s54, 1
      %p58 = scmp.eq.s32.totalorder %s20, 1
      %p59 = scmp.ne.s32.totalorder %s54, %s56
      %p60 = scmp.eq.s32.totalorder %s20, 0
      %p61 = por %p59, %p60
      %p62 = scmp.ne.s32.totalorder %s54, %s56
      %p63 = scmp.eq.s32.totalorder %s25, 1
      %p64 = por %p62, %p63
      %p65 = scmp.ne.s32.totalorder %s56, %s57
      %p66 = scmp.eq.s32.totalorder %s25, 0
      %p67 = por %p65, %p66
      %p68 = scmp.ne.s32.totalorder %s56, %s57
      %p69 = scmp.eq.s32.totalorder %s26, 1
      %p70 = por %p68, %p69
      %p72 = scmp.ne.s32.totalorder %s57, %s71
      %p73 = scmp.eq.s32.totalorder %s26, 0
      %p74 = por %p72, %p73
      %s76 = sadd.s32 %s75, 1
      %p79 = scmp.eq.s32.totalorder %s20, 1
      %p80 = scmp.ne.s32.totalorder %s75, %s77
      %p81 = scmp.eq.s32.totalorder %s20, 0
      %p82 = por %p80, %p81
      %p83 = scmp.ne.s32.totalorder %s75, %s77
      %p84 = scmp.eq.s32.totalorder %s25, 1
      %p85 = por %p83, %p84
      %p86 = scmp.ne.s32.totalorder %s77, %s78
      %p87 = scmp.eq.s32.totalorder %s25, 0
      %p88 = por %p86, %p87
      %p89 = scmp.ne.s32.totalorder %s77, %s78
      %p90 = scmp.eq.s32.totalorder %s26, 1
      %p91 = por %p89, %p90
      %p93 = scmp.ne.s32.totalorder %s78, %s92
      %p94 = scmp.eq.s32.totalorder %s26, 0
      %p95 = por %p93, %p94
      %s97 = sadd.s32 %s96, 1
      %p100 = scmp.eq.s32.totalorder %s20, 1
      %p101 = scmp.ne.s32.totalorder %s96, %s98
      %p102 = scmp.eq.s32.totalorder %s20, 0
      %p103 = por %p101, %p102
      %p104 = scmp.ne.s32.totalorder %s96, %s98
      %p105 = scmp.eq.s32.totalorder %s25, 1
      %p106 = por %p104, %p105
      %p107 = scmp.ne.s32.totalorder %s98, %s99
      %p108 = scmp.eq.s32.totalorder %s25, 0
      %p109 = por %p107, %p108
      %p110 = scmp.ne.s32.totalorder %s98, %s99
      %p111 = scmp.eq.s32.totalorder %s26, 1
      %p112 = por %p110, %p111
      %p114 = scmp.ne.s32.totalorder %s99, %s113
      %p115 = scmp.eq.s32.totalorder %s26, 0
      %p116 = por %p114, %p115
      %s118 = sadd.s32 %s117, 1
      %p121 = scmp.eq.s32.totalorder %s20, 1
      %p122 = scmp.ne.s32.totalorder %s117, %s119
      %p123 = scmp.eq.s32.totalorder %s20, 0
      %p124 = por %p122, %p123
      %p125 = scmp.ne.s32.totalorder %s117, %s119
      %p126 = scmp.eq.s32.totalorder %s25, 1
      %p127 = por %p125, %p126
      %p128 = scmp.ne.s32.totalorder %s119, %s120
      %p129 = scmp.eq.s32.totalorder %s25, 0
      %p130 = por %p128, %p129
      %p131 = scmp.ne.s32.totalorder %s119, %s120
      %p132 = scmp.eq.s32.totalorder %s26, 1
      %p133 = por %p131, %p132
      %p135 = scmp.ne.s32.totalorder %s120, %s134
      %p136 = scmp.eq.s32.totalorder %s26, 0
      %p137 = por %p135, %p136
      %s139 = sadd.s32 %s138, 1
      %p142 = scmp.eq.s32.totalorder %s20, 1
      %p143 = scmp.ne.s32.totalorder %s138, %s140
      %p144 = scmp.eq.s32.totalorder %s20, 0
      %p145 = por %p143, %p144
      %p146 = scmp.ne.s32.totalorder %s138, %s140
      %p147 = scmp.eq.s32.totalorder %s25, 1
      %p148 = por %p146, %p147
      %p149 = scmp.ne.s32.totalorder %s140, %s141
      %p150 = scmp.eq.s32.totalorder %s25, 0
      %p151 = por %p149, %p150
      %p152 = scmp.ne.s32.totalorder %s140, %s141
      %p153 = scmp.eq.s32.totalorder %s26, 1
      %p154 = por %p152, %p153
      %p156 = scmp.ne.s32.totalorder %s141, %s155
      %p157 = scmp.eq.s32.totalorder %s26, 0
      %p158 = por %p156, %p157
      %s160 = sadd.s32 %s159, 1
      %p163 = scmp.eq.s32.totalorder %s20, 1
      %p164 = scmp.ne.s32.totalorder %s159, %s161
      %p165 = scmp.eq.s32.totalorder %s20, 0
      %p166 = por %p164, %p165
      %p167 = scmp.ne.s32.totalorder %s159, %s161
      %p168 = scmp.eq.s32.totalorder %s25, 1
      %p169 = por %p167, %p168
      %p170 = scmp.ne.s32.totalorder %s161, %s162
      %p171 = scmp.eq.s32.totalorder %s25, 0
      %p172 = por %p170, %p171
      %p173 = scmp.ne.s32.totalorder %s161, %s162
      %p174 = scmp.eq.s32.totalorder %s26, 1
      %p175 = por %p173, %p174
      %p177 = scmp.ne.s32.totalorder %s162, %s176
      %p178 = scmp.eq.s32.totalorder %s26, 0
      %p179 = por %p177, %p178
      %s181 = sadd.s32 %s180, 1
      %p184 = scmp.eq.s32.totalorder %s20, 1
      %p185 = scmp.ne.s32.totalorder %s180, %s182
      %p186 = scmp.eq.s32.totalorder %s20, 0
      %p187 = por %p185, %p186
      %p188 = scmp.ne.s32.totalorder %s180, %s182
      %p189 = scmp.eq.s32.totalorder %s25, 1
      %p190 = por %p188, %p189
      %p191 = scmp.ne.s32.totalorder %s182, %s183
      %p192 = scmp.eq.s32.totalorder %s25, 0
      %p193 = por %p191, %p192
      %p194 = scmp.ne.s32.totalorder %s182, %s183
      %p195 = scmp.eq.s32.totalorder %s26, 1
      %p196 = por %p194, %p195
      %p198 = scmp.ne.s32.totalorder %s183, %s197
      %p199 = scmp.eq.s32.totalorder %s26, 0
      %p200 = por %p198, %p199
      %s202 = sadd.s32 %s201, 1
      %p205 = scmp.eq.s32.totalorder %s20, 1
      %p206 = scmp.ne.s32.totalorder %s201, %s203
      %p207 = scmp.eq.s32.totalorder %s20, 0
      %p208 = por %p206, %p207
      %p209 = scmp.ne.s32.totalorder %s201, %s203
      %p210 = scmp.eq.s32.totalorder %s25, 1
      %p211 = por %p209, %p210
      %p212 = scmp.ne.s32.totalorder %s203, %s204
      %p213 = scmp.eq.s32.totalorder %s25, 0
      %p214 = por %p212, %p213
      %p215 = scmp.ne.s32.totalorder %s203, %s204
      %p216 = scmp.eq.s32.totalorder %s26, 1
      %p217 = por %p215, %p216
      %p219 = scmp.ne.s32.totalorder %s204, %s218
      %p220 = scmp.eq.s32.totalorder %s26, 0
      %p221 = por %p219, %p220
      %s222 = ssub.s32 %s20, %s27
      %p223 = scmp.eq.s32.totalorder %s222, 0
      %s225 = sadd.s32 %s224, 1
      %s226 = scalar_select %p223, %s224, %s225
      %p229 = pneg %p223
      %p230 = scmp.eq.s32.totalorder %s20, 1
      %p231 = por %p229, %p230
      %p232 = scmp.ne.s32.totalorder %s224, %s227
      %p233 = scmp.eq.s32.totalorder %s20, 0
      %p234 = por %p232, %p233
      %p235 = scmp.ne.s32.totalorder %s224, %s227
      %p236 = scmp.eq.s32.totalorder %s25, 1
      %p237 = por %p235, %p236
      %p238 = scmp.ne.s32.totalorder %s227, %s228
      %p239 = scmp.eq.s32.totalorder %s25, 0
      %p240 = por %p238, %p239
      %p241 = scmp.ne.s32.totalorder %s227, %s228
      %p242 = scmp.eq.s32.totalorder %s26, 1
      %p243 = por %p241, %p242
      %p245 = scmp.ne.s32.totalorder %s228, %s244
      %p246 = scmp.eq.s32.totalorder %s26, 0
      %p247 = por %p245, %p246
      %p248 = scmp.le.s32.totalorder 1, %s20
      %p249 = scmp.lt.s32.totalorder %s20, 3
      %p250 = pnand %p248, %p249
      %p251 = pneg %p250
      // Predicated region
      $region9: #{tpu_custom_call.1} parent=5 // pred_check
        _
      $region10: #{tpu_custom_call.1} parent=5 // pred_check_branch
        %253 = sbr.rel (%p250) target = $region12
      $region11: #{tpu_custom_call.1} parent=5 // pred_region
        %s254 = ssub.s32 %s20, 1
        // Predicated region
        $region13: #{tpu_custom_call.1} parent=11 // pred_check
          %p255 = pneg %p67
        $region14: #{tpu_custom_call.1} parent=11 // pred_check_branch
          %257 = sbr.rel (%p255) target = $region16
        $region15: #{tpu_custom_call.1} parent=11 // pred_region
          _
        $region16: #{tpu_custom_call.1} parent=11 // pred_fallthru
          _
        // Predicated region
        $region17: #{tpu_custom_call.1} parent=11 // pred_check
          %p258 = pneg %p88
        $region18: #{tpu_custom_call.1} parent=11 // pred_check_branch
          %260 = sbr.rel (%p258) target = $region20
        $region19: #{tpu_custom_call.1} parent=11 // pred_region
          _
        $region20: #{tpu_custom_call.1} parent=11 // pred_fallthru
          _
        // Predicated region
        $region21: #{tpu_custom_call.1} parent=11 // pred_check
          %p261 = pneg %p109
        $region22: #{tpu_custom_call.1} parent=11 // pred_check_branch
          %263 = sbr.rel (%p261) target = $region24
        $region23: #{tpu_custom_call.1} parent=11 // pred_region
          _
        $region24: #{tpu_custom_call.1} parent=11 // pred_fallthru
          _
        // Predicated region
        $region25: #{tpu_custom_call.1} parent=11 // pred_check
          %p264 = pneg %p130
        $region26: #{tpu_custom_call.1} parent=11 // pred_check_branch
          %266 = sbr.rel (%p264) target = $region28
        $region27: #{tpu_custom_call.1} parent=11 // pred_region
          _
        $region28: #{tpu_custom_call.1} parent=11 // pred_fallthru
          _
        // Predicated region
        $region29: #{tpu_custom_call.1} parent=11 // pred_check
          %p267 = pneg %p151
        $region30: #{tpu_custom_call.1} parent=11 // pred_check_branch
          %269 = sbr.rel (%p267) target = $region32
        $region31: #{tpu_custom_call.1} parent=11 // pred_region
          _
        $region32: #{tpu_custom_call.1} parent=11 // pred_fallthru
          _
        // Predicated region
        $region33: #{tpu_custom_call.1} parent=11 // pred_check
          %p270 = pneg %p172
        $region34: #{tpu_custom_call.1} parent=11 // pred_check_branch
          %272 = sbr.rel (%p270) target = $region36
        $region35: #{tpu_custom_call.1} parent=11 // pred_region
          _
        $region36: #{tpu_custom_call.1} parent=11 // pred_fallthru
          _
        // Predicated region
        $region37: #{tpu_custom_call.1} parent=11 // pred_check
          %p273 = pneg %p193
        $region38: #{tpu_custom_call.1} parent=11 // pred_check_branch
          %275 = sbr.rel (%p273) target = $region40
        $region39: #{tpu_custom_call.1} parent=11 // pred_region
          _
        $region40: #{tpu_custom_call.1} parent=11 // pred_fallthru
          _
        // Predicated region
        $region41: #{tpu_custom_call.1} parent=11 // pred_check
          %p276 = pneg %p214
        $region42: #{tpu_custom_call.1} parent=11 // pred_check_branch
          %278 = sbr.rel (%p276) target = $region44
        $region43: #{tpu_custom_call.1} parent=11 // pred_region
          _
        $region44: #{tpu_custom_call.1} parent=11 // pred_fallthru
          _
      $region12: #{tpu_custom_call.1} parent=5 // pred_fallthru
        _
      %p279 = scmp.lt.s32.totalorder %s20, 2
      // Predicated region
      $region45: #{tpu_custom_call.1} parent=5 // pred_check
        %p280 = pneg %p279
      $region46: #{tpu_custom_call.1} parent=5 // pred_check_branch
        %282 = sbr.rel (%p280) target = $region48
      $region47: #{tpu_custom_call.1} parent=5 // pred_region
        // Predicated region
        $region49: #{tpu_custom_call.1} parent=47 // pred_check
          %p283 = pneg %p40
        $region50: #{tpu_custom_call.1} parent=47 // pred_check_branch
          %285 = sbr.rel (%p283) target = $region52
        $region51: #{tpu_custom_call.1} parent=47 // pred_region
          %p286 = scmp.lt.s32.totalorder %s20, 1
          %s287 = scalar_select %p286, %s20, 1
          %s288 = smul.addr %s287, 2
          %s289 = scalar_lea.vmem %s0, %s288
        $region52: #{tpu_custom_call.1} parent=47 // pred_fallthru
          _
      $region48: #{tpu_custom_call.1} parent=5 // pred_fallthru
        _
      %p290 = scmp.le.s32.totalorder 1, %s20
      %p291 = scmp.lt.s32.totalorder %s20, 3
      %p292 = pnand %p290, %p291
      %p293 = pneg %p292
      // Predicated region
      $region53: #{tpu_custom_call.1} parent=5 // pred_check
        _
      $region54: #{tpu_custom_call.1} parent=5 // pred_check_branch
        %295 = sbr.rel (%p292) target = $region56
      $region55: #{tpu_custom_call.1} parent=5 // pred_region
        %s296 = ssub.s32 %s20, 1
        %p297 = scmp.lt.s32.totalorder %s25, 1
        %s298 = scalar_select %p297, %s25, 1
        %s299 = smul.addr %s298, 2
        %s300 = scalar_lea.vmem %s0, %s299
        %p301 = pneg %p46
        %p302 = pneg %p43
        %p303 = pneg %p67
        %p304 = pneg %p64
        %p305 = pneg %p88
        %p306 = pneg %p85
        %p307 = pneg %p109
        %p308 = pneg %p106
        %p309 = pneg %p130
        %p310 = pneg %p127
        %p311 = pneg %p151
        %p312 = pneg %p148
        %p313 = pneg %p172
        %p314 = pneg %p169
        %p315 = pneg %p193
        %p316 = pneg %p190
        %p317 = pneg %p214
        %p318 = pneg %p211
        %p319 = pneg %p240
        %p320 = pneg %p237
        %s321 = sand.u32 %s227, 1
        %s322 = scalar_lea.sflag [#allocation4], %s321
        %s323 = sand.u32 %s227, 1
        %s324 = scalar_lea.vmem [#allocation3], %s323
        %p325 = scmp.lt.s32.totalorder %s25, 1
        %s326 = scalar_select %p325, %s25, 1
        %s327 = smul.addr %s326, 2
        %s328 = scalar_lea.vmem %s0, %s327
        %v330 = vld [vmem:[%s328] sm:$0x3]
        %v331 = vld [vmem:[%s1] sm:$0xf]
        %v332 = vld [vmem:[%s1 + $0x4] sm:$0xf]
        %v333 = vld [vmem:[%s1 + $0x8] sm:$0xf]
        %v334 = vld [vmem:[%s1 + $0xc] sm:$0xf]
        %v335 = vld [vmem:[%s1 + $0x10] sm:$0xf]
        %v336 = vld [vmem:[%s1 + $0x14] sm:$0xf]
        %v337 = vld [vmem:[%s1 + $0x18] sm:$0xf]
        %v338 = vld [vmem:[%s1 + $0x1c] sm:$0xf]
        %v339 = vld [vmem:[%s1 + $0x20] sm:$0xf]
        %v340 = vld [vmem:[%s1 + $0x24] sm:$0xf]
        %v341 = vld [vmem:[%s1 + $0x28] sm:$0xf]
        %v342 = vld [vmem:[%s1 + $0x2c] sm:$0xf]
        %v343 = vld [vmem:[%s1 + $0x30] sm:$0xf]
        %v344 = vld [vmem:[%s1 + $0x34] sm:$0xf]
        %v345 = vld [vmem:[%s1 + $0x38] sm:$0xf]
        %v346 = vld [vmem:[%s1 + $0x3c] sm:$0xf]
        %v347 = vld [vmem:[%s2] sm:$0xff]
        %v348 = vld [vmem:[%s2 + $0x8] sm:$0xff]
        %v349 = vld [vmem:[%s2 + $0x10] sm:$0xff]
        %v350 = vld [vmem:[%s2 + $0x18] sm:$0xff]
        %v351 = vld [vmem:[%s2 + $0x20] sm:$0xff]
        %v352 = vld [vmem:[%s2 + $0x28] sm:$0xff]
        %v353 = vld [vmem:[%s2 + $0x30] sm:$0xff]
        %v354 = vld [vmem:[%s2 + $0x38] sm:$0xff]
        %v355 = vld [vmem:[%s2 + $0x40] sm:$0xff]
        %v356 = vld [vmem:[%s2 + $0x48] sm:$0xff]
        %v357 = vld [vmem:[%s2 + $0x50] sm:$0xff]
        %v358 = vld [vmem:[%s2 + $0x58] sm:$0xff]
        %v359 = vld [vmem:[%s2 + $0x60] sm:$0xff]
        %v360 = vld [vmem:[%s2 + $0x68] sm:$0xff]
        %v361 = vld [vmem:[%s2 + $0x70] sm:$0xff]
        %v362 = vld [vmem:[%s2 + $0x78] sm:$0xff]
        %364 = vset.pattern.permute.xlu0 0
        %365 = vperm.xlu0 %364, %v347
        %v366 = vpop.permute.xlu0 %365
        %369 = vset.pattern.permute.xlu0 0
        %370 = vperm.xlu0 %369, %v348
        %v371 = vpop.permute.xlu0 %370
        %374 = vset.pattern.permute.xlu0 0
        %375 = vperm.xlu0 %374, %v349
        %v376 = vpop.permute.xlu0 %375
        %379 = vset.pattern.permute.xlu0 0
        %380 = vperm.xlu0 %379, %v350
        %v381 = vpop.permute.xlu0 %380
        %384 = vset.pattern.permute.xlu0 0
        %385 = vperm.xlu0 %384, %v351
        %v386 = vpop.permute.xlu0 %385
        %389 = vset.pattern.permute.xlu0 0
        %390 = vperm.xlu0 %389, %v352
        %v391 = vpop.permute.xlu0 %390
        %394 = vset.pattern.permute.xlu0 0
        %395 = vperm.xlu0 %394, %v353
        %v396 = vpop.permute.xlu0 %395
        %399 = vset.pattern.permute.xlu0 0
        %400 = vperm.xlu0 %399, %v354
        %v401 = vpop.permute.xlu0 %400
        %404 = vset.pattern.permute.xlu0 0
        %405 = vperm.xlu0 %404, %v355
        %v406 = vpop.permute.xlu0 %405
        %409 = vset.pattern.permute.xlu0 0
        %410 = vperm.xlu0 %409, %v356
        %v411 = vpop.permute.xlu0 %410
        %414 = vset.pattern.permute.xlu0 0
        %415 = vperm.xlu0 %414, %v357
        %v416 = vpop.permute.xlu0 %415
        %419 = vset.pattern.permute.xlu0 0
        %420 = vperm.xlu0 %419, %v358
        %v421 = vpop.permute.xlu0 %420
        %424 = vset.pattern.permute.xlu0 0
        %425 = vperm.xlu0 %424, %v359
        %v426 = vpop.permute.xlu0 %425
        %429 = vset.pattern.permute.xlu0 0
        %430 = vperm.xlu0 %429, %v360
        %v431 = vpop.permute.xlu0 %430
        %434 = vset.pattern.permute.xlu0 0
        %435 = vperm.xlu0 %434, %v361
        %v436 = vpop.permute.xlu0 %435
        %439 = vset.pattern.permute.xlu0 0
        %440 = vperm.xlu0 %439, %v362
        %v441 = vpop.permute.xlu0 %440
        %v459 = vunpack.c.l.b16 %v331
        %v460 = vunpack.c.l.b16 %v332
        %v461 = vunpack.c.l.b16 %v333
        %v462 = vunpack.c.l.b16 %v334
        %v463 = vunpack.c.l.b16 %v335
        %v464 = vunpack.c.l.b16 %v336
        %v465 = vunpack.c.l.b16 %v337
        %v466 = vunpack.c.l.b16 %v338
        %v467 = vunpack.c.l.b16 %v339
        %v468 = vunpack.c.l.b16 %v340
        %v469 = vunpack.c.l.b16 %v341
        %v470 = vunpack.c.l.b16 %v342
        %v471 = vunpack.c.l.b16 %v343
        %v472 = vunpack.c.l.b16 %v344
        %v473 = vunpack.c.l.b16 %v345
        %v474 = vunpack.c.l.b16 %v346
        %v475 = vpack.c.b16 %v460, %v459
        %v476 = vpack.c.b16 %v462, %v461
        %v477 = vpack.c.b16 %v464, %v463
        %v478 = vpack.c.b16 %v466, %v465
        %v479 = vpack.c.b16 %v468, %v467
        %v480 = vpack.c.b16 %v470, %v469
        %v481 = vpack.c.b16 %v472, %v471
        %v482 = vpack.c.b16 %v474, %v473
        %vm483 = vcmask 31744
        %v485 = vsel %vm483, %v475, 0
        %v488 = vsel %vm483, %v476, 0
        %v491 = vsel %vm483, %v477, 0
        %v494 = vsel %vm483, %v478, 0
        %v497 = vsel %vm483, %v479, 0
        %v500 = vsel %vm483, %v480, 0
        %v503 = vsel %vm483, %v481, 0
        %v506 = vsel %vm483, %v482, 0
        %vm508 = vcmask 1041408
        %v510 = vsel %vm508, %v330, 0
        %512 = vmatprep.subr.bf16.mxu0 0
        %513 = vmatpush1.bf16.msra.mxu0 %v510
        %514 = vmatprep.subr.bf16.mxu0 0
        %515 = vmatpush1.bf16.msra.mxu0 0
        %516 = vmatprep.subr.bf16.mxu0 0
        %517 = vmatpush1.bf16.msra.mxu0 0
        %518 = vmatprep.subr.bf16.mxu0 0
        %519 = vmatpush1.bf16.msra.mxu0 0
        %520 = vmatprep.subr.bf16.mxu0 0
        %521 = vmatpush1.bf16.msra.mxu0 0
        %522 = vmatprep.subr.bf16.mxu0 0
        %523 = vmatpush1.bf16.msra.mxu0 0
        %524 = vmatprep.subr.bf16.mxu0 0
        %525 = vmatpush1.bf16.msra.mxu0 0
        %526 = vmatprep.subr.bf16.mxu0 0
        %527 = vmatpush1.bf16.msra.mxu0 0
        %528 = vmatprep.subr.bf16.mxu0 0
        %529 = vmatpush1.bf16.msra.mxu0 0
        %530 = vmatprep.subr.bf16.mxu0 0
        %531 = vmatpush1.bf16.msra.mxu0 0
        %532 = vmatprep.subr.bf16.mxu0 0
        %533 = vmatpush1.bf16.msra.mxu0 0
        %534 = vmatprep.subr.bf16.mxu0 0
        %535 = vmatpush1.bf16.msra.mxu0 0
        %536 = vmatprep.subr.bf16.mxu0 0
        %537 = vmatpush1.bf16.msra.mxu0 0
        %538 = vmatprep.subr.bf16.mxu0 0
        %539 = vmatpush1.bf16.msra.mxu0 0
        %540 = vmatprep.subr.bf16.mxu0 0
        %541 = vmatpush1.bf16.msra.mxu0 0
        %542 = vmatprep.subr.bf16.mxu0 0
        %543 = vmatpush1.bf16.msra.mxu0 0
        %544 = vmatprep.mubr.bf16.mxu0 0
        %545 = vmatmul.mubr.bf16.gmra.mrb[0].mxu0 %v485
        %v546 = vpop.f32.mrb[0].mxu0
        %v547 = vadd.f32 %v366, %v546
        %v548 = vpop.f32.mrb[0].mxu0
        %v549 = vpop.f32.mrb[0].mxu0
        %v550 = vadd.f32 %v371, %v549
        %v551 = vpop.f32.mrb[0].mxu0
        %552 = vmatprep.mubr.bf16.mxu0 0
        %553 = vmatmul.mubr.bf16.gmra.mrb[0].mxu0 %v488
        %v554 = vpop.f32.mrb[0].mxu0
        %v555 = vadd.f32 %v376, %v554
        %v556 = vpop.f32.mrb[0].mxu0
        %v557 = vpop.f32.mrb[0].mxu0
        %v558 = vadd.f32 %v381, %v557
        %v559 = vpop.f32.mrb[0].mxu0
        %560 = vmatprep.mubr.bf16.mxu0 0
        %561 = vmatmul.mubr.bf16.gmra.mrb[0].mxu0 %v491
        %v562 = vpop.f32.mrb[0].mxu0
        %v563 = vadd.f32 %v386, %v562
        %v564 = vpop.f32.mrb[0].mxu0
        %v565 = vpop.f32.mrb[0].mxu0
        %v566 = vadd.f32 %v391, %v565
        %v567 = vpop.f32.mrb[0].mxu0
        %568 = vmatprep.mubr.bf16.mxu0 0
        %569 = vmatmul.mubr.bf16.gmra.mrb[0].mxu0 %v494
        %v570 = vpop.f32.mrb[0].mxu0
        %v571 = vadd.f32 %v396, %v570
        %v572 = vpop.f32.mrb[0].mxu0
        %v573 = vpop.f32.mrb[0].mxu0
        %v574 = vadd.f32 %v401, %v573
        %v575 = vpop.f32.mrb[0].mxu0
        %576 = vmatprep.mubr.bf16.mxu0 0
        %577 = vmatmul.mubr.bf16.gmra.mrb[0].mxu0 %v497
        %v578 = vpop.f32.mrb[0].mxu0
        %v579 = vadd.f32 %v406, %v578
        %v580 = vpop.f32.mrb[0].mxu0
        %v581 = vpop.f32.mrb[0].mxu0
        %v582 = vadd.f32 %v411, %v581
        %v583 = vpop.f32.mrb[0].mxu0
        %584 = vmatprep.mubr.bf16.mxu0 0
        %585 = vmatmul.mubr.bf16.gmra.mrb[0].mxu0 %v500
        %v586 = vpop.f32.mrb[0].mxu0
        %v587 = vadd.f32 %v416, %v586
        %v588 = vpop.f32.mrb[0].mxu0
        %v589 = vpop.f32.mrb[0].mxu0
        %v590 = vadd.f32 %v421, %v589
        %v591 = vpop.f32.mrb[0].mxu0
        %592 = vmatprep.mubr.bf16.mxu0 0
        %593 = vmatmul.mubr.bf16.gmra.mrb[0].mxu0 %v503
        %v594 = vpop.f32.mrb[0].mxu0
        %v595 = vadd.f32 %v426, %v594
        %v596 = vpop.f32.mrb[0].mxu0
        %v597 = vpop.f32.mrb[0].mxu0
        %v598 = vadd.f32 %v431, %v597
        %v599 = vpop.f32.mrb[0].mxu0
        %600 = vmatprep.mubr.bf16.mxu0 0
        %601 = vmatmul.mubr.bf16.gmra.mrb[0].mxu0 %v506
        %v602 = vpop.f32.mrb[0].mxu0
        %v603 = vadd.f32 %v436, %v602
        %v604 = vpop.f32.mrb[0].mxu0
        %v605 = vpop.f32.mrb[0].mxu0
        %v606 = vadd.f32 %v441, %v605
        %v607 = vpop.f32.mrb[0].mxu0
        %608 = vdwg.mxu0
        %v609 = vmax.f32 %v547, 0.0
        %v610 = vmax.f32 %v550, 0.0
        %v611 = vmax.f32 %v555, 0.0
        %v612 = vmax.f32 %v558, 0.0
        %v613 = vmax.f32 %v563, 0.0
        %v614 = vmax.f32 %v566, 0.0
        %v615 = vmax.f32 %v571, 0.0
        %v616 = vmax.f32 %v574, 0.0
        %v617 = vmax.f32 %v579, 0.0
        %v618 = vmax.f32 %v582, 0.0
        %v619 = vmax.f32 %v587, 0.0
        %v620 = vmax.f32 %v590, 0.0
        %v621 = vmax.f32 %v595, 0.0
        %v622 = vmax.f32 %v598, 0.0
        %v623 = vmax.f32 %v603, 0.0
        %v624 = vmax.f32 %v606, 0.0
        %v625 = vld [vmem:[%s3] sm:$0xf]
        %v626 = vld [vmem:[%s3 + $0x4] sm:$0xf]
        %v627 = vld [vmem:[%s3 + $0x8] sm:$0xf]
        %v628 = vld [vmem:[%s3 + $0xc] sm:$0xf]
        %v629 = vld [vmem:[%s3 + $0x10] sm:$0xf]
        %v630 = vld [vmem:[%s3 + $0x14] sm:$0xf]
        %v631 = vld [vmem:[%s3 + $0x18] sm:$0xf]
        %v632 = vld [vmem:[%s3 + $0x1c] sm:$0xf]
        %v633 = vld [vmem:[%s3 + $0x20] sm:$0xf]
        %v634 = vld [vmem:[%s3 + $0x24] sm:$0xf]
        %v635 = vld [vmem:[%s3 + $0x28] sm:$0xf]
        %v636 = vld [vmem:[%s3 + $0x2c] sm:$0xf]
        %v637 = vld [vmem:[%s3 + $0x30] sm:$0xf]
        %v638 = vld [vmem:[%s3 + $0x34] sm:$0xf]
        %v639 = vld [vmem:[%s3 + $0x38] sm:$0xf]
        %v640 = vld [vmem:[%s3 + $0x3c] sm:$0xf]
        %v641 = vpack.c.bf16 %v610, %v609
        %v642 = vpack.c.bf16 %v612, %v611
        %v643 = vpack.c.bf16 %v614, %v613
        %v644 = vpack.c.bf16 %v616, %v615
        %v645 = vpack.c.bf16 %v618, %v617
        %v646 = vpack.c.bf16 %v620, %v619
        %v647 = vpack.c.bf16 %v622, %v621
        %v648 = vpack.c.bf16 %v624, %v623
        %v649 = vld [vmem:[%s4] sm:$0xff]
        %v650 = vld [vmem:[%s4 + $0x8] sm:$0xff]
        %v651 = vld [vmem:[%s4 + $0x10] sm:$0xff]
        %v652 = vld [vmem:[%s4 + $0x18] sm:$0xff]
        %v653 = vld [vmem:[%s4 + $0x20] sm:$0xff]
        %v654 = vld [vmem:[%s4 + $0x28] sm:$0xff]
        %v655 = vld [vmem:[%s4 + $0x30] sm:$0xff]
        %v656 = vld [vmem:[%s4 + $0x38] sm:$0xff]
        %v657 = vld [vmem:[%s4 + $0x40] sm:$0xff]
        %v658 = vld [vmem:[%s4 + $0x48] sm:$0xff]
        %v659 = vld [vmem:[%s4 + $0x50] sm:$0xff]
        %v660 = vld [vmem:[%s4 + $0x58] sm:$0xff]
        %v661 = vld [vmem:[%s4 + $0x60] sm:$0xff]
        %v662 = vld [vmem:[%s4 + $0x68] sm:$0xff]
        %v663 = vld [vmem:[%s4 + $0x70] sm:$0xff]
        %v664 = vld [vmem:[%s4 + $0x78] sm:$0xff]
        %666 = vset.pattern.permute.xlu0 0
        %667 = vperm.xlu0 %666, %v649
        %v668 = vpop.permute.xlu0 %667
        %671 = vset.pattern.permute.xlu0 0
        %672 = vperm.xlu0 %671, %v650
        %v673 = vpop.permute.xlu0 %672
        %676 = vset.pattern.permute.xlu0 0
        %677 = vperm.xlu0 %676, %v651
        %v678 = vpop.permute.xlu0 %677
        %681 = vset.pattern.permute.xlu0 0
        %682 = vperm.xlu0 %681, %v652
        %v683 = vpop.permute.xlu0 %682
        %686 = vset.pattern.permute.xlu0 0
        %687 = vperm.xlu0 %686, %v653
        %v688 = vpop.permute.xlu0 %687
        %691 = vset.pattern.permute.xlu0 0
        %692 = vperm.xlu0 %691, %v654
        %v693 = vpop.permute.xlu0 %692
        %696 = vset.pattern.permute.xlu0 0
        %697 = vperm.xlu0 %696, %v655
        %v698 = vpop.permute.xlu0 %697
        %701 = vset.pattern.permute.xlu0 0
        %702 = vperm.xlu0 %701, %v656
        %v703 = vpop.permute.xlu0 %702
        %706 = vset.pattern.permute.xlu0 0
        %707 = vperm.xlu0 %706, %v657
        %v708 = vpop.permute.xlu0 %707
        %711 = vset.pattern.permute.xlu0 0
        %712 = vperm.xlu0 %711, %v658
        %v713 = vpop.permute.xlu0 %712
        %716 = vset.pattern.permute.xlu0 0
        %717 = vperm.xlu0 %716, %v659
        %v718 = vpop.permute.xlu0 %717
        %721 = vset.pattern.permute.xlu0 0
        %722 = vperm.xlu0 %721, %v660
        %v723 = vpop.permute.xlu0 %722
        %726 = vset.pattern.permute.xlu0 0
        %727 = vperm.xlu0 %726, %v661
        %v728 = vpop.permute.xlu0 %727
        %731 = vset.pattern.permute.xlu0 0
        %732 = vperm.xlu0 %731, %v662
        %v733 = vpop.permute.xlu0 %732
        %736 = vset.pattern.permute.xlu0 0
        %737 = vperm.xlu0 %736, %v663
        %v738 = vpop.permute.xlu0 %737
        %741 = vset.pattern.permute.xlu0 0
        %742 = vperm.xlu0 %741, %v664
        %v743 = vpop.permute.xlu0 %742
        %v761 = vunpack.c.l.b16 %v625
        %v762 = vunpack.c.l.b16 %v626
        %v763 = vunpack.c.l.b16 %v627
        %v764 = vunpack.c.l.b16 %v628
        %v765 = vunpack.c.l.b16 %v629
        %v766 = vunpack.c.l.b16 %v630
        %v767 = vunpack.c.l.b16 %v631
        %v768 = vunpack.c.l.b16 %v632
        %v769 = vunpack.c.l.b16 %v633
        %v770 = vunpack.c.l.b16 %v634
        %v771 = vunpack.c.l.b16 %v635
        %v772 = vunpack.c.l.b16 %v636
        %v773 = vunpack.c.l.b16 %v637
        %v774 = vunpack.c.l.b16 %v638
        %v775 = vunpack.c.l.b16 %v639
        %v776 = vunpack.c.l.b16 %v640
        %v777 = vpack.c.b16 %v762, %v761
        %v778 = vpack.c.b16 %v764, %v763
        %v779 = vpack.c.b16 %v766, %v765
        %v780 = vpack.c.b16 %v768, %v767
        %v781 = vpack.c.b16 %v770, %v769
        %v782 = vpack.c.b16 %v772, %v771
        %v783 = vpack.c.b16 %v774, %v773
        %v784 = vpack.c.b16 %v776, %v775
        %793 = vmatprep.subr.bf16.mxu0 0
        %794 = vmatpush1.bf16.msra.mxu0 %v641
        %795 = vmatprep.subr.bf16.mxu0 0
        %796 = vmatpush1.bf16.msra.mxu0 %v642
        %797 = vmatprep.subr.bf16.mxu0 0
        %798 = vmatpush1.bf16.msra.mxu0 %v643
        %799 = vmatprep.subr.bf16.mxu0 0
        %800 = vmatpush1.bf16.msra.mxu0 %v644
        %801 = vmatprep.subr.bf16.mxu0 0
        %802 = vmatpush1.bf16.msra.mxu0 %v645
        %803 = vmatprep.subr.bf16.mxu0 0
        %804 = vmatpush1.bf16.msra.mxu0 %v646
        %805 = vmatprep.subr.bf16.mxu0 0
        %806 = vmatpush1.bf16.msra.mxu0 %v647
        %807 = vmatprep.subr.bf16.mxu0 0
        %808 = vmatpush1.bf16.msra.mxu0 %v648
        %809 = vmatprep.subr.bf16.mxu0 0
        %810 = vmatpush1.bf16.msra.mxu0 0
        %811 = vmatprep.subr.bf16.mxu0 0
        %812 = vmatpush1.bf16.msra.mxu0 0
        %813 = vmatprep.subr.bf16.mxu0 0
        %814 = vmatpush1.bf16.msra.mxu0 0
        %815 = vmatprep.subr.bf16.mxu0 0
        %816 = vmatpush1.bf16.msra.mxu0 0
        %817 = vmatprep.subr.bf16.mxu0 0
        %818 = vmatpush1.bf16.msra.mxu0 0
        %819 = vmatprep.subr.bf16.mxu0 0
        %820 = vmatpush1.bf16.msra.mxu0 0
        %821 = vmatprep.subr.bf16.mxu0 0
        %822 = vmatpush1.bf16.msra.mxu0 0
        %823 = vmatprep.subr.bf16.mxu0 0
        %824 = vmatpush1.bf16.msra.mxu0 0
        %825 = vmatprep.mubr.bf16.mxu0 0
        %826 = vmatmul.mubr.bf16.gmra.mrb[0].mxu0 %v777
        %v827 = vpop.f32.mrb[0].mxu0
        %v828 = vadd.f32 %v668, %v827
        %v829 = vpop.f32.mrb[0].mxu0
        %v830 = vpop.f32.mrb[0].mxu0
        %v831 = vadd.f32 %v673, %v830
        %v832 = vpop.f32.mrb[0].mxu0
        %833 = vmatprep.mubr.bf16.mxu0 0
        %834 = vmatmul.mubr.bf16.gmra.mrb[0].mxu0 %v778
        %v835 = vpop.f32.mrb[0].mxu0
        %v836 = vadd.f32 %v678, %v835
        %v837 = vpop.f32.mrb[0].mxu0
        %v838 = vpop.f32.mrb[0].mxu0
        %v839 = vadd.f32 %v683, %v838
        %v840 = vpop.f32.mrb[0].mxu0
        %841 = vmatprep.mubr.bf16.mxu0 0
        %842 = vmatmul.mubr.bf16.gmra.mrb[0].mxu0 %v779
        %v843 = vpop.f32.mrb[0].mxu0
        %v844 = vadd.f32 %v688, %v843
        %v845 = vpop.f32.mrb[0].mxu0
        %v846 = vpop.f32.mrb[0].mxu0
        %v847 = vadd.f32 %v693, %v846
        %v848 = vpop.f32.mrb[0].mxu0
        %849 = vmatprep.mubr.bf16.mxu0 0
        %850 = vmatmul.mubr.bf16.gmra.mrb[0].mxu0 %v780
        %v851 = vpop.f32.mrb[0].mxu0
        %v852 = vadd.f32 %v698, %v851
        %v853 = vpop.f32.mrb[0].mxu0
        %v854 = vpop.f32.mrb[0].mxu0
        %v855 = vadd.f32 %v703, %v854
        %v856 = vpop.f32.mrb[0].mxu0
        %857 = vmatprep.mubr.bf16.mxu0 0
        %858 = vmatmul.mubr.bf16.gmra.mrb[0].mxu0 %v781
        %v859 = vpop.f32.mrb[0].mxu0
        %v860 = vadd.f32 %v708, %v859
        %v861 = vpop.f32.mrb[0].mxu0
        %v862 = vpop.f32.mrb[0].mxu0
        %v863 = vadd.f32 %v713, %v862
        %v864 = vpop.f32.mrb[0].mxu0
        %865 = vmatprep.mubr.bf16.mxu0 0
        %866 = vmatmul.mubr.bf16.gmra.mrb[0].mxu0 %v782
        %v867 = vpop.f32.mrb[0].mxu0
        %v868 = vadd.f32 %v718, %v867
        %v869 = vpop.f32.mrb[0].mxu0
        %v870 = vpop.f32.mrb[0].mxu0
        %v871 = vadd.f32 %v723, %v870
        %v872 = vpop.f32.mrb[0].mxu0
        %873 = vmatprep.mubr.bf16.mxu0 0
        %874 = vmatmul.mubr.bf16.gmra.mrb[0].mxu0 %v783
        %v875 = vpop.f32.mrb[0].mxu0
        %v876 = vadd.f32 %v728, %v875
        %v877 = vpop.f32.mrb[0].mxu0
        %v878 = vpop.f32.mrb[0].mxu0
        %v879 = vadd.f32 %v733, %v878
        %v880 = vpop.f32.mrb[0].mxu0
        %881 = vmatprep.mubr.bf16.mxu0 0
        %882 = vmatmul.mubr.bf16.gmra.mrb[0].mxu0 %v784
        %v883 = vpop.f32.mrb[0].mxu0
        %v884 = vadd.f32 %v738, %v883
        %v885 = vpop.f32.mrb[0].mxu0
        %v886 = vpop.f32.mrb[0].mxu0
        %v887 = vadd.f32 %v743, %v886
        %v888 = vpop.f32.mrb[0].mxu0
        %889 = vdwg.mxu0
        %v890 = vmax.f32 %v828, 0.0
        %v891 = vmax.f32 %v831, 0.0
        %v892 = vmax.f32 %v836, 0.0
        %v893 = vmax.f32 %v839, 0.0
        %v894 = vmax.f32 %v844, 0.0
        %v895 = vmax.f32 %v847, 0.0
        %v896 = vmax.f32 %v852, 0.0
        %v897 = vmax.f32 %v855, 0.0
        %v898 = vmax.f32 %v860, 0.0
        %v899 = vmax.f32 %v863, 0.0
        %v900 = vmax.f32 %v868, 0.0
        %v901 = vmax.f32 %v871, 0.0
        %v902 = vmax.f32 %v876, 0.0
        %v903 = vmax.f32 %v879, 0.0
        %v904 = vmax.f32 %v884, 0.0
        %v905 = vmax.f32 %v887, 0.0
        %v906 = vld [vmem:[%s5] sm:$0xf]
        %v907 = vld [vmem:[%s5 + $0x4] sm:$0xf]
        %v908 = vld [vmem:[%s5 + $0x8] sm:$0xf]
        %v909 = vld [vmem:[%s5 + $0xc] sm:$0xf]
        %v910 = vld [vmem:[%s5 + $0x10] sm:$0xf]
        %v911 = vld [vmem:[%s5 + $0x14] sm:$0xf]
        %v912 = vld [vmem:[%s5 + $0x18] sm:$0xf]
        %v913 = vld [vmem:[%s5 + $0x1c] sm:$0xf]
        %v914 = vld [vmem:[%s5 + $0x20] sm:$0xf]
        %v915 = vld [vmem:[%s5 + $0x24] sm:$0xf]
        %v916 = vld [vmem:[%s5 + $0x28] sm:$0xf]
        %v917 = vld [vmem:[%s5 + $0x2c] sm:$0xf]
        %v918 = vld [vmem:[%s5 + $0x30] sm:$0xf]
        %v919 = vld [vmem:[%s5 + $0x34] sm:$0xf]
        %v920 = vld [vmem:[%s5 + $0x38] sm:$0xf]
        %v921 = vld [vmem:[%s5 + $0x3c] sm:$0xf]
        %v922 = vpack.c.bf16 %v891, %v890
        %v923 = vpack.c.bf16 %v893, %v892
        %v924 = vpack.c.bf16 %v895, %v894
        %v925 = vpack.c.bf16 %v897, %v896
        %v926 = vpack.c.bf16 %v899, %v898
        %v927 = vpack.c.bf16 %v901, %v900
        %v928 = vpack.c.bf16 %v903, %v902
        %v929 = vpack.c.bf16 %v905, %v904
        %v930 = vld [vmem:[%s6] sm:$0xff]
        %v931 = vld [vmem:[%s6 + $0x8] sm:$0xff]
        %v932 = vld [vmem:[%s6 + $0x10] sm:$0xff]
        %v933 = vld [vmem:[%s6 + $0x18] sm:$0xff]
        %v934 = vld [vmem:[%s6 + $0x20] sm:$0xff]
        %v935 = vld [vmem:[%s6 + $0x28] sm:$0xff]
        %v936 = vld [vmem:[%s6 + $0x30] sm:$0xff]
        %v937 = vld [vmem:[%s6 + $0x38] sm:$0xff]
        %v938 = vld [vmem:[%s6 + $0x40] sm:$0xff]
        %v939 = vld [vmem:[%s6 + $0x48] sm:$0xff]
        %v940 = vld [vmem:[%s6 + $0x50] sm:$0xff]
        %v941 = vld [vmem:[%s6 + $0x58] sm:$0xff]
        %v942 = vld [vmem:[%s6 + $0x60] sm:$0xff]
        %v943 = vld [vmem:[%s6 + $0x68] sm:$0xff]
        %v944 = vld [vmem:[%s6 + $0x70] sm:$0xff]
        %v945 = vld [vmem:[%s6 + $0x78] sm:$0xff]
        %947 = vset.pattern.permute.xlu0 0
        %948 = vperm.xlu0 %947, %v930
        %v949 = vpop.permute.xlu0 %948
        %952 = vset.pattern.permute.xlu0 0
        %953 = vperm.xlu0 %952, %v931
        %v954 = vpop.permute.xlu0 %953
        %957 = vset.pattern.permute.xlu0 0
        %958 = vperm.xlu0 %957, %v932
        %v959 = vpop.permute.xlu0 %958
        %962 = vset.pattern.permute.xlu0 0
        %963 = vperm.xlu0 %962, %v933
        %v964 = vpop.permute.xlu0 %963
        %967 = vset.pattern.permute.xlu0 0
        %968 = vperm.xlu0 %967, %v934
        %v969 = vpop.permute.xlu0 %968
        %972 = vset.pattern.permute.xlu0 0
        %973 = vperm.xlu0 %972, %v935
        %v974 = vpop.permute.xlu0 %973
        %977 = vset.pattern.permute.xlu0 0
        %978 = vperm.xlu0 %977, %v936
        %v979 = vpop.permute.xlu0 %978
        %982 = vset.pattern.permute.xlu0 0
        %983 = vperm.xlu0 %982, %v937
        %v984 = vpop.permute.xlu0 %983
        %987 = vset.pattern.permute.xlu0 0
        %988 = vperm.xlu0 %987, %v938
        %v989 = vpop.permute.xlu0 %988
        %992 = vset.pattern.permute.xlu0 0
        %993 = vperm.xlu0 %992, %v939
        %v994 = vpop.permute.xlu0 %993
        %997 = vset.pattern.permute.xlu0 0
        %998 = vperm.xlu0 %997, %v940
        %v999 = vpop.permute.xlu0 %998
        %1002 = vset.pattern.permute.xlu0 0
        %1003 = vperm.xlu0 %1002, %v941
        %v1004 = vpop.permute.xlu0 %1003
        %1007 = vset.pattern.permute.xlu0 0
        %1008 = vperm.xlu0 %1007, %v942
        %v1009 = vpop.permute.xlu0 %1008
        %1012 = vset.pattern.permute.xlu0 0
        %1013 = vperm.xlu0 %1012, %v943
        %v1014 = vpop.permute.xlu0 %1013
        %1017 = vset.pattern.permute.xlu0 0
        %1018 = vperm.xlu0 %1017, %v944
        %v1019 = vpop.permute.xlu0 %1018
        %1022 = vset.pattern.permute.xlu0 0
        %1023 = vperm.xlu0 %1022, %v945
        %v1024 = vpop.permute.xlu0 %1023
        %v1042 = vunpack.c.l.b16 %v906
        %v1043 = vunpack.c.l.b16 %v907
        %v1044 = vunpack.c.l.b16 %v908
        %v1045 = vunpack.c.l.b16 %v909
        %v1046 = vunpack.c.l.b16 %v910
        %v1047 = vunpack.c.l.b16 %v911
        %v1048 = vunpack.c.l.b16 %v912
        %v1049 = vunpack.c.l.b16 %v913
        %v1050 = vunpack.c.l.b16 %v914
        %v1051 = vunpack.c.l.b16 %v915
        %v1052 = vunpack.c.l.b16 %v916
        %v1053 = vunpack.c.l.b16 %v917
        %v1054 = vunpack.c.l.b16 %v918
        %v1055 = vunpack.c.l.b16 %v919
        %v1056 = vunpack.c.l.b16 %v920
        %v1057 = vunpack.c.l.b16 %v921
        %v1058 = vpack.c.b16 %v1043, %v1042
        %v1059 = vpack.c.b16 %v1045, %v1044
        %v1060 = vpack.c.b16 %v1047, %v1046
        %v1061 = vpack.c.b16 %v1049, %v1048
        %v1062 = vpack.c.b16 %v1051, %v1050
        %v1063 = vpack.c.b16 %v1053, %v1052
        %v1064 = vpack.c.b16 %v1055, %v1054
        %v1065 = vpack.c.b16 %v1057, %v1056
        %1074 = vmatprep.subr.bf16.mxu0 0
        %1075 = vmatpush1.bf16.msra.mxu0 %v922
        %1076 = vmatprep.subr.bf16.mxu0 0
        %1077 = vmatpush1.bf16.msra.mxu0 %v923
        %1078 = vmatprep.subr.bf16.mxu0 0
        %1079 = vmatpush1.bf16.msra.mxu0 %v924
        %1080 = vmatprep.subr.bf16.mxu0 0
        %1081 = vmatpush1.bf16.msra.mxu0 %v925
        %1082 = vmatprep.subr.bf16.mxu0 0
        %1083 = vmatpush1.bf16.msra.mxu0 %v926
        %1084 = vmatprep.subr.bf16.mxu0 0
        %1085 = vmatpush1.bf16.msra.mxu0 %v927
        %1086 = vmatprep.subr.bf16.mxu0 0
        %1087 = vmatpush1.bf16.msra.mxu0 %v928
        %1088 = vmatprep.subr.bf16.mxu0 0
        %1089 = vmatpush1.bf16.msra.mxu0 %v929
        %1090 = vmatprep.subr.bf16.mxu0 0
        %1091 = vmatpush1.bf16.msra.mxu0 0
        %1092 = vmatprep.subr.bf16.mxu0 0
        %1093 = vmatpush1.bf16.msra.mxu0 0
        %1094 = vmatprep.subr.bf16.mxu0 0
        %1095 = vmatpush1.bf16.msra.mxu0 0
        %1096 = vmatprep.subr.bf16.mxu0 0
        %1097 = vmatpush1.bf16.msra.mxu0 0
        %1098 = vmatprep.subr.bf16.mxu0 0
        %1099 = vmatpush1.bf16.msra.mxu0 0
        %1100 = vmatprep.subr.bf16.mxu0 0
        %1101 = vmatpush1.bf16.msra.mxu0 0
        %1102 = vmatprep.subr.bf16.mxu0 0
        %1103 = vmatpush1.bf16.msra.mxu0 0
        %1104 = vmatprep.subr.bf16.mxu0 0
        %1105 = vmatpush1.bf16.msra.mxu0 0
        %1106 = vmatprep.mubr.bf16.mxu0 0
        %1107 = vmatmul.mubr.bf16.gmra.mrb[0].mxu0 %v1058
        %v1108 = vpop.f32.mrb[0].mxu0
        %v1109 = vadd.f32 %v949, %v1108
        %v1110 = vpop.f32.mrb[0].mxu0
        %v1111 = vpop.f32.mrb[0].mxu0
        %v1112 = vadd.f32 %v954, %v1111
        %v1113 = vpop.f32.mrb[0].mxu0
        %1114 = vmatprep.mubr.bf16.mxu0 0
        %1115 = vmatmul.mubr.bf16.gmra.mrb[0].mxu0 %v1059
        %v1116 = vpop.f32.mrb[0].mxu0
        %v1117 = vadd.f32 %v959, %v1116
        %v1118 = vpop.f32.mrb[0].mxu0
        %v1119 = vpop.f32.mrb[0].mxu0
        %v1120 = vadd.f32 %v964, %v1119
        %v1121 = vpop.f32.mrb[0].mxu0
        %1122 = vmatprep.mubr.bf16.mxu0 0
        %1123 = vmatmul.mubr.bf16.gmra.mrb[0].mxu0 %v1060
        %v1124 = vpop.f32.mrb[0].mxu0
        %v1125 = vadd.f32 %v969, %v1124
        %v1126 = vpop.f32.mrb[0].mxu0
        %v1127 = vpop.f32.mrb[0].mxu0
        %v1128 = vadd.f32 %v974, %v1127
        %v1129 = vpop.f32.mrb[0].mxu0
        %1130 = vmatprep.mubr.bf16.mxu0 0
        %1131 = vmatmul.mubr.bf16.gmra.mrb[0].mxu0 %v1061
        %v1132 = vpop.f32.mrb[0].mxu0
        %v1133 = vadd.f32 %v979, %v1132
        %v1134 = vpop.f32.mrb[0].mxu0
        %v1135 = vpop.f32.mrb[0].mxu0
        %v1136 = vadd.f32 %v984, %v1135
        %v1137 = vpop.f32.mrb[0].mxu0
        %1138 = vmatprep.mubr.bf16.mxu0 0
        %1139 = vmatmul.mubr.bf16.gmra.mrb[0].mxu0 %v1062
        %v1140 = vpop.f32.mrb[0].mxu0
        %v1141 = vadd.f32 %v989, %v1140
        %v1142 = vpop.f32.mrb[0].mxu0
        %v1143 = vpop.f32.mrb[0].mxu0
        %v1144 = vadd.f32 %v994, %v1143
        %v1145 = vpop.f32.mrb[0].mxu0
        %1146 = vmatprep.mubr.bf16.mxu0 0
        %1147 = vmatmul.mubr.bf16.gmra.mrb[0].mxu0 %v1063
        %v1148 = vpop.f32.mrb[0].mxu0
        %v1149 = vadd.f32 %v999, %v1148
        %v1150 = vpop.f32.mrb[0].mxu0
        %v1151 = vpop.f32.mrb[0].mxu0
        %v1152 = vadd.f32 %v1004, %v1151
        %v1153 = vpop.f32.mrb[0].mxu0
        %1154 = vmatprep.mubr.bf16.mxu0 0
        %1155 = vmatmul.mubr.bf16.gmra.mrb[0].mxu0 %v1064
        %v1156 = vpop.f32.mrb[0].mxu0
        %v1157 = vadd.f32 %v1009, %v1156
        %v1158 = vpop.f32.mrb[0].mxu0
        %v1159 = vpop.f32.mrb[0].mxu0
        %v1160 = vadd.f32 %v1014, %v1159
        %v1161 = vpop.f32.mrb[0].mxu0
        %1162 = vmatprep.mubr.bf16.mxu0 0
        %1163 = vmatmul.mubr.bf16.gmra.mrb[0].mxu0 %v1065
        %v1164 = vpop.f32.mrb[0].mxu0
        %v1165 = vadd.f32 %v1019, %v1164
        %v1166 = vpop.f32.mrb[0].mxu0
        %v1167 = vpop.f32.mrb[0].mxu0
        %v1168 = vadd.f32 %v1024, %v1167
        %v1169 = vpop.f32.mrb[0].mxu0
        %1170 = vdwg.mxu0
        %v1171 = vmax.f32 %v1109, 0.0
        %v1172 = vmax.f32 %v1112, 0.0
        %v1173 = vmax.f32 %v1117, 0.0
        %v1174 = vmax.f32 %v1120, 0.0
        %v1175 = vmax.f32 %v1125, 0.0
        %v1176 = vmax.f32 %v1128, 0.0
        %v1177 = vmax.f32 %v1133, 0.0
        %v1178 = vmax.f32 %v1136, 0.0
        %v1179 = vmax.f32 %v1141, 0.0
        %v1180 = vmax.f32 %v1144, 0.0
        %v1181 = vmax.f32 %v1149, 0.0
        %v1182 = vmax.f32 %v1152, 0.0
        %v1183 = vmax.f32 %v1157, 0.0
        %v1184 = vmax.f32 %v1160, 0.0
        %v1185 = vmax.f32 %v1165, 0.0
        %v1186 = vmax.f32 %v1168, 0.0
        %v1187 = vld [vmem:[%s7] sm:$0x1]
        %v1188 = vpack.c.bf16 %v1172, %v1171
        %v1189 = vpack.c.bf16 %v1174, %v1173
        %v1190 = vpack.c.bf16 %v1176, %v1175
        %v1191 = vpack.c.bf16 %v1178, %v1177
        %v1192 = vpack.c.bf16 %v1180, %v1179
        %v1193 = vpack.c.bf16 %v1182, %v1181
        %v1194 = vpack.c.bf16 %v1184, %v1183
        %v1195 = vpack.c.bf16 %v1186, %v1185
        %v1196 = vld [vmem:[#allocation2] sm:$0x1]
        %1198 = vset.pattern.permute.xlu0 0
        %1199 = vperm.xlu0 %1198, %v1196
        %v1200 = vpop.permute.xlu0 %1199
        %v1202 = vlaneseq
        %v1203 = vshrl.u32 %v1202, 7
        %v1204 = vsub.s32 0, %v1203
        %v1205 = vrot.slane %v1200, %v1204
        %1206 = vmatprep.subr.bf16.mxu0 0
        %1207 = vmatpush1.bf16.msra.mxu0 %v1188
        %1208 = vmatprep.subr.bf16.mxu0 0
        %1209 = vmatpush1.bf16.msra.mxu0 %v1189
        %1210 = vmatprep.subr.bf16.mxu0 0
        %1211 = vmatpush1.bf16.msra.mxu0 %v1190
        %1212 = vmatprep.subr.bf16.mxu0 0
        %1213 = vmatpush1.bf16.msra.mxu0 %v1191
        %1214 = vmatprep.subr.bf16.mxu0 0
        %1215 = vmatpush1.bf16.msra.mxu0 %v1192
        %1216 = vmatprep.subr.bf16.mxu0 0
        %1217 = vmatpush1.bf16.msra.mxu0 %v1193
        %1218 = vmatprep.subr.bf16.mxu0 0
        %1219 = vmatpush1.bf16.msra.mxu0 %v1194
        %1220 = vmatprep.subr.bf16.mxu0 0
        %1221 = vmatpush1.bf16.msra.mxu0 %v1195
        %1222 = vmatprep.subr.bf16.mxu0 0
        %1223 = vmatpush1.bf16.msra.mxu0 0
        %1224 = vmatprep.subr.bf16.mxu0 0
        %1225 = vmatpush1.bf16.msra.mxu0 0
        %1226 = vmatprep.subr.bf16.mxu0 0
        %1227 = vmatpush1.bf16.msra.mxu0 0
        %1228 = vmatprep.subr.bf16.mxu0 0
        %1229 = vmatpush1.bf16.msra.mxu0 0
        %1230 = vmatprep.subr.bf16.mxu0 0
        %1231 = vmatpush1.bf16.msra.mxu0 0
        %1232 = vmatprep.subr.bf16.mxu0 0
        %1233 = vmatpush1.bf16.msra.mxu0 0
        %1234 = vmatprep.subr.bf16.mxu0 0
        %1235 = vmatpush1.bf16.msra.mxu0 0
        %1236 = vmatprep.subr.bf16.mxu0 0
        %1237 = vmatpush1.bf16.msra.mxu0 0
        %1238 = vmatprep.mubr.bf16.mxu0 0
        %1239 = vmatmul.mubr.bf16.gmra.mrb[0].mxu0 %v1187
        %v1240 = vpop.f32.mrb[0].mxu0
        %v1241 = vadd.f32 %v1205, %v1240
        %v1242 = vpop.f32.mrb[0].mxu0
        %v1243 = vpop.f32.mrb[0].mxu0
        %v1244 = vpop.f32.mrb[0].mxu0
        %1245 = vdwg.mxu0
        %v1246 = vsub.f32 0.0, %v1241
        %v1247 = vmul.f32 %v1246, 1.442695
        %v1248 = vpow.pop %v1247
        %v1249 = vadd.f32 %v1248, 1.0
        %v1250 = vrcp.pop %v1249
        %1251 = vst [vmem:[%s324] sm:$0x1] %v1250
        %s1252 = sand.u32 %s227, 1
        %s1253 = scalar_lea.sflag [#allocation4], %s1252
        %s1254 = sand.u32 %s227, 1
        %s1255 = scalar_lea.vmem [#allocation3], %s1254
        // Predicated region
        $region57: #{tpu_custom_call.1} parent=55 // pred_check
          %p1256 = pneg %p237
        $region58: #{tpu_custom_call.1} parent=55 // pred_check_branch
          %1258 = sbr.rel (%p1256) target = $region60
        $region59: #{tpu_custom_call.1} parent=55 // pred_region
          %s1260 = ssub.s32 16, 16
          %1261 = vsyncadd %s1253, %s1260
          %s1262 = smul.addr %s25, 16
          %s1263 = scalar_lea.hbm %s9, %s1262
          %s1265 = sshll.u32 %s1255, 4
          %s1266 = int_to_ptr.vmem [resolvable:$true] %s1265
          %1268 = dma.vmem_to_hbm [thread:$0]  %s1266, 16, %s1263, %s1253
        $region60: #{tpu_custom_call.1} parent=55 // pred_fallthru
          _
      $region56: #{tpu_custom_call.1} parent=5 // pred_fallthru
        _
      %p1269 = scmp.le.s32.totalorder 2, %s20
      // Predicated region
      $region61: #{tpu_custom_call.1} parent=5 // pred_check
        %p1270 = pneg %p1269
      $region62: #{tpu_custom_call.1} parent=5 // pred_check_branch
        %1272 = sbr.rel (%p1270) target = $region64
      $region63: #{tpu_custom_call.1} parent=5 // pred_region
        %s1273 = ssub.s32 %s20, 2
        // Predicated region
        $region65: #{tpu_custom_call.1} parent=63 // pred_check
          %p1274 = pneg %p243
        $region66: #{tpu_custom_call.1} parent=63 // pred_check_branch
          %1276 = sbr.rel (%p1274) target = $region68
        $region67: #{tpu_custom_call.1} parent=63 // pred_region
          %s1277 = sand.u32 %s228, 1
          %s1278 = scalar_lea.sflag [#allocation4], %s1277
          %s1279 = sand.u32 %s228, 1
          %s1280 = scalar_lea.vmem [#allocation3], %s1279
          %1281 = dma.done %s1278, 16
        $region68: #{tpu_custom_call.1} parent=63 // pred_fallthru
          _
      $region64: #{tpu_custom_call.1} parent=5 // pred_fallthru
        _
    $region6: #{tpu_custom_call.1} parent=1 // loop_footer
      %s24 = sadd.s32 1, %s20
    $region7: #{tpu_custom_call.1} parent=1 // loop_footer_branch
      %19 = sbr.rel target = $region3
    $region8: #{tpu_custom_call.1} parent=1 // loop_exit
      _
    %1282 = vsyncpa [#allocation4], 1
    %s1283 = scalar_lea.sflag [#allocation4], 1
    %1284 = vsyncpa %s1283, 1

</llo_original>
